<compile_context>
chip_gen: v7x
topology: tpu7x:2x2x1
jax: 0.10.0
libtpu: 0.0.40
codegen_flags: <defaults>
</compile_context>

<pallas_src>
import jax
import jax.numpy as jnp
from jax.experimental import pallas as pl
from jax.experimental.pallas import tpu as pltpu

# Problem sizes (small, consistent with the module's forward).
B = 2      # batch
S = 16     # sequence length
H = 32     # hidden size
C = 4      # number of classes / emotions
K = 2      # token indices per class


def demux_kernel(sel_ref,            # VMEM (B*C, B*S) f32  constant selection matrix (1/K entries)
                 hs_ref,             # VMEM (B*S, H)   f32  flattened last_hidden_state
                 w1_ref, b1_ref,     # VMEM (H, H), (1, H)
                 w2_ref,             # VMEM (1, H)          second Linear weight as a row
                 b2_ref,             # SMEM (1,)            second Linear bias (scalar)
                 out_ref):           # VMEM (B*C, 1)
    # Gather + mean for every (batch, class) pair as one MXU matmul:
    #   emo[b*C + c, :] = (1/K) * sum_k hs[b*S + class_inds[c, k], :]
    emo = jnp.dot(sel_ref[...], hs_ref[...],
                  preferred_element_type=jnp.float32)                 # (B*C, H)

    # classifier: Linear(H,H) -> Tanh -> (Dropout = id at eval) -> Linear(H,1)
    h = jnp.tanh(
        jnp.dot(emo, w1_ref[...], preferred_element_type=jnp.float32)
        + b1_ref[...]                                                 # bias added once on the fused slab
    )                                                                 # (B*C, H)

    # Second linear as VPU multiply + lane reduce; b2 read straight from SMEM.
    logits = jnp.sum(h * w2_ref[...], axis=-1, keepdims=True) + b2_ref[0]   # (B*C, 1)
    out_ref[...] = logits


def demux_forward(last_hidden_state, class_inds, w1, b1, w2, b2):
    """last_hidden_state: [B, S, H] f32; class_inds: [C, K] int32 -> [B, C] f32."""
    Bb, Ss, Hh = last_hidden_state.shape
    Cc, Kk = class_inds.shape

    # Constant per-class selection matrix (C, S): 1/K at (c, class_inds[c, k]).
    # Duplicate indices accumulate, matching index_select(...).mean(1).
    w_sel = jnp.zeros((Cc, Ss), jnp.float32).at[
        jnp.arange(Cc)[:, None], class_inds
    ].add(1.0 / Kk)
    # Block-diagonal across the batch so all B*C class representations come
    # out of a single (B*C, B*S) x (B*S, H) matmul.
    sel = jnp.kron(jnp.eye(Bb, dtype=jnp.float32), w_sel)             # (B*C, B*S)

    hs_flat = last_hidden_state.reshape(Bb * Ss, Hh)                  # (B*S, H)
    b1_row = b1.reshape(1, Hh)
    w2_row = w2.reshape(1, Hh)                                        # from (H, 1)
    b2_vec = b2.reshape(1)

    out = pl.pallas_call(
        demux_kernel,
        out_shape=jax.ShapeDtypeStruct((Bb * Cc, 1), jnp.float32),
        grid=(1,),                                                    # single invocation
        in_specs=[
            pl.BlockSpec((Bb * Cc, Bb * Ss), lambda i: (0, 0)),       # selection matrix
            pl.BlockSpec((Bb * Ss, Hh), lambda i: (0, 0)),            # hidden states (whole batch)
            pl.BlockSpec((Hh, Hh), lambda i: (0, 0)),                 # w1
            pl.BlockSpec((1, Hh), lambda i: (0, 0)),                  # b1
            pl.BlockSpec((1, Hh), lambda i: (0, 0)),                  # w2 (as row)
            pl.BlockSpec(memory_space=pltpu.MemorySpace.SMEM),        # b2 scalar
        ],
        out_specs=pl.BlockSpec((Bb * Cc, 1), lambda i: (0, 0)),
    )(sel, hs_flat, w1, b1_row, w2_row, b2_vec)

    return out.reshape(Bb, Cc)


def demux_reference(last_hidden_state, class_inds, w1, b1, w2, b2):
    """Plain-JAX reference mirroring the PyTorch forward (eval mode)."""
    gathered = last_hidden_state[:, class_inds, :]       # [B, C, K, H]
    emo = gathered.mean(axis=2)                          # [B, C, H]
    h = jnp.tanh(emo @ w1 + b1)                          # [B, C, H]
    logits = h @ w2 + b2                                 # [B, C, 1]
    return logits[..., 0]                                # [B, C]


if __name__ == "__main__":
    key = jax.random.PRNGKey(0)
    k_hs, k_w1, k_b1, k_w2, k_b2 = jax.random.split(key, 5)

    # Synthetic "last_hidden_state" standing in for the BERT output.
    last_hidden_state = jax.random.normal(k_hs, (B, S, H), dtype=jnp.float32)

    # class_inds: C classes, K prompt-token indices each (constant, prompt first).
    class_inds = jnp.arange(C * K, dtype=jnp.int32).reshape(C, K)   # tokens 0..7

    # Deterministic classifier parameters (shapes from nn.Linear(H,H), nn.Linear(H,1)).
    w1 = 0.02 * jax.random.normal(k_w1, (H, H), dtype=jnp.float32)
    b1 = 0.02 * jax.random.normal(k_b1, (H,), dtype=jnp.float32)
    w2 = 0.02 * jax.random.normal(k_w2, (H, 1), dtype=jnp.float32)
    b2 = 0.02 * jax.random.normal(k_b2, (1,), dtype=jnp.float32)

    out = demux_forward(last_hidden_state, class_inds, w1, b1, w2, b2)
    out = jax.block_until_ready(out)

    ref = demux_reference(last_hidden_state, class_inds, w1, b1, w2, b2)
    assert out.shape == (B, C), out.shape
    assert jnp.allclose(out, ref, atol=1e-5, rtol=1e-5), (out, ref)

    print("KERNEL_OK")
</pallas_src>

<mosaic_0001>
module attributes {stable_mosaic.version = 11 : i64} {
  func.func @demux_kernel(%arg0: i32, %arg1: memref<8x32xf32, #tpu.memory_space<vmem>>, %arg2: memref<32x32xf32, #tpu.memory_space<vmem>>, %arg3: memref<32x32xf32, #tpu.memory_space<vmem>>, %arg4: memref<1x32xf32, #tpu.memory_space<vmem>>, %arg5: memref<1x32xf32, #tpu.memory_space<vmem>>, %arg6: memref<1xf32, #tpu.memory_space<smem>>, %arg7: memref<8x1xf32, #tpu.memory_space<vmem>>) attributes {dimension_semantics = [#tpu.dimension_semantics<arbitrary>], iteration_bounds = array<i64: 1>, scalar_prefetch = 0 : i64, scratch_operands = 0 : i64, tpu.core_type = #tpu.core_type<tc>, window_params = [{pipeline_mode = #tpu.pipeline_mode<synchronous>, transform_indices = @transform_0, window_bounds = array<i64: 8, 32>}, {pipeline_mode = #tpu.pipeline_mode<synchronous>, transform_indices = @transform_1, window_bounds = array<i64: 32, 32>}, {pipeline_mode = #tpu.pipeline_mode<synchronous>, transform_indices = @transform_2, window_bounds = array<i64: 32, 32>}, {pipeline_mode = #tpu.pipeline_mode<synchronous>, transform_indices = @transform_3, window_bounds = array<i64: 1, 32>}, {pipeline_mode = #tpu.pipeline_mode<synchronous>, transform_indices = @transform_4, window_bounds = array<i64: 1, 32>}, {transform_indices = @transform_5, window_bounds = array<i64: 1>}, {pipeline_mode = #tpu.pipeline_mode<synchronous>, transform_indices = @transform_6, window_bounds = array<i64: 8, 1>}]} {
    %c0 = arith.constant 0 : index
    %c0_0 = arith.constant 0 : index
    %0 = vector.load %arg1[%c0, %c0_0] : memref<8x32xf32, #tpu.memory_space<vmem>>, vector<8x32xf32>
    %c0_1 = arith.constant 0 : index
    %c0_2 = arith.constant 0 : index
    %1 = vector.load %arg2[%c0_1, %c0_2] : memref<32x32xf32, #tpu.memory_space<vmem>>, vector<32x32xf32>
    %cst = arith.constant dense<0.000000e+00> : vector<8x32xf32>
    %2 = tpu.matmul %0, %1, %cst {dimension_numbers = #tpu.dot_dimension_numbers<[1], [0], [0], [1], [0, 0, 1, 1], [], []>} : vector<8x32xf32>, vector<32x32xf32>, vector<8x32xf32> -> vector<8x32xf32>
    %c0_3 = arith.constant 0 : index
    %c0_4 = arith.constant 0 : index
    %3 = vector.load %arg3[%c0_3, %c0_4] : memref<32x32xf32, #tpu.memory_space<vmem>>, vector<32x32xf32>
    %cst_5 = arith.constant dense<0.000000e+00> : vector<8x32xf32>
    %4 = tpu.matmul %2, %3, %cst_5 {dimension_numbers = #tpu.dot_dimension_numbers<[1], [0], [0], [1], [0, 0, 1, 1], [], []>} : vector<8x32xf32>, vector<32x32xf32>, vector<8x32xf32> -> vector<8x32xf32>
    %c0_6 = arith.constant 0 : index
    %c0_7 = arith.constant 0 : index
    %5 = vector.load %arg4[%c0_6, %c0_7] : memref<1x32xf32, #tpu.memory_space<vmem>>, vector<1x32xf32>
    %6 = vector.broadcast %5 : vector<1x32xf32> to vector<8x32xf32>
    %7 = arith.addf %4, %6 : vector<8x32xf32>
    %8 = math.tanh %7 : vector<8x32xf32>
    %c0_8 = arith.constant 0 : index
    %c0_9 = arith.constant 0 : index
    %9 = vector.load %arg5[%c0_8, %c0_9] : memref<1x32xf32, #tpu.memory_space<vmem>>, vector<1x32xf32>
    %10 = vector.broadcast %9 : vector<1x32xf32> to vector<8x32xf32>
    %11 = arith.mulf %8, %10 : vector<8x32xf32>
    %cst_10 = arith.constant dense<0.000000e+00> : vector<8xf32>
    %12 = vector.multi_reduction <add>, %11, %cst_10 [1] : vector<8x32xf32> to vector<8xf32>
    %13 = vector.shape_cast %12 : vector<8xf32> to vector<8x1xf32>
    %c0_11 = arith.constant 0 : index
    %14 = memref.load %arg6[%c0_11] : memref<1xf32, #tpu.memory_space<smem>>
    %15 = vector.broadcast %14 : f32 to vector<8x1xf32>
    %16 = arith.addf %13, %15 : vector<8x1xf32>
    %c0_12 = arith.constant 0 : index
    %c0_13 = arith.constant 0 : index
    %17 = vector.load %arg7[%c0_12, %c0_13] : memref<8x1xf32, #tpu.memory_space<vmem>>, vector<8x1xf32>
    tpu.vector_store %arg7[%c0_12, %c0_13], %16 {strides = array<i32>} : memref<8x1xf32, #tpu.memory_space<vmem>>, vector<8x1xf32>,
    return
  }
  func.func @transform_0(%arg0: i32) -> (i32, i32) {
    %c0_i32 = arith.constant 0 : i32
    %c0_i32_0 = arith.constant 0 : i32
    %c0_i32_1 = arith.constant 0 : i32
    return %c0_i32, %c0_i32_0 : i32, i32
  }
  func.func @transform_1(%arg0: i32) -> (i32, i32) {
    %c0_i32 = arith.constant 0 : i32
    %c0_i32_0 = arith.constant 0 : i32
    %c0_i32_1 = arith.constant 0 : i32
    return %c0_i32, %c0_i32_0 : i32, i32
  }
  func.func @transform_2(%arg0: i32) -> (i32, i32) {
    %c0_i32 = arith.constant 0 : i32
    %c0_i32_0 = arith.constant 0 : i32
    %c0_i32_1 = arith.constant 0 : i32
    return %c0_i32, %c0_i32_0 : i32, i32
  }
  func.func @transform_3(%arg0: i32) -> (i32, i32) {
    %c0_i32 = arith.constant 0 : i32
    %c0_i32_0 = arith.constant 0 : i32
    %c0_i32_1 = arith.constant 0 : i32
    return %c0_i32, %c0_i32_0 : i32, i32
  }
  func.func @transform_4(%arg0: i32) -> (i32, i32) {
    %c0_i32 = arith.constant 0 : i32
    %c0_i32_0 = arith.constant 0 : i32
    %c0_i32_1 = arith.constant 0 : i32
    return %c0_i32, %c0_i32_0 : i32, i32
  }
  func.func @transform_5(%arg0: i32) -> i32 {
    %c0_i32 = arith.constant 0 : i32
    %c0_i32_0 = arith.constant 0 : i32
    return %c0_i32 : i32
  }
  func.func @transform_6(%arg0: i32) -> (i32, i32) {
    %c0_i32 = arith.constant 0 : i32
    %c0_i32_0 = arith.constant 0 : i32
    %c0_i32_1 = arith.constant 0 : i32
    return %c0_i32, %c0_i32_0 : i32, i32
  }
}

</mosaic_0001>

<llo_original>
// kernel: tpu_custom_call.1
$region0: #{tpu_custom_call.1}
  #allocation0 [shape = 'u32[]', space=smem, size = 0x4, offset = 0x4, fixed_abs, tag = 'smem constant byte address 0x4 - core index']
  #allocation1 [shape = 'u32[144,128]{1,0:T(1,128)}', space=vmem, size = 0x12000, scoped, tag = 'internal scratch']
  #allocation2 [shape = 'f32[1]{0:T(128)S(6)}', space=smem, size = 0x200, scoped, tag = 'scoped memory for tpu_custom_call.1']
  %s0 = inlined_call_operand.hbm [shape: f32[8,32], index: 0, kind: input, shape index: {}]
  %s1 = inlined_call_operand.hbm [shape: f32[32,32], index: 1, kind: input, shape index: {}]
  %s2 = inlined_call_operand.hbm [shape: f32[32,32], index: 2, kind: input, shape index: {}]
  %s3 = inlined_call_operand.vmem [shape: f32[1,32], index: 3, kind: input, shape index: {}]
  %s4 = inlined_call_operand.vmem [shape: f32[1,32], index: 4, kind: input, shape index: {}]
  %s5 = inlined_call_operand.<no memory space> [shape: f32[1], index: 5, kind: input, shape index: {}]
  %s6 = inlined_call_operand.vmem [shape: f32[8,1], index: 6, kind: output, shape index: {}]
  %s7 = sld [smem:[#allocation0]]
  $region46: #{tpu_custom_call.1} parent=0
    _
  %s9 = ssub.s32 1, %s7
  %s10 = scalar_select 0, %s9, %s7
  %11 = sst [smem:[#allocation2]] %s5
  $region1: #{tpu_custom_call.1} parent=0
    #allocation3 [shape = 'u8[4096]{0}', space=vmem, size = 0x1000, scoped, tag = 'input window, operand 0, single buffered']
    #allocation4 [shape = 's32[1]{0}', space=sflag, size = 0x4, scoped, tag = 'scoped memory for tpu_custom_call.1']
    #allocation5 [shape = 'u8[16384]{0}', space=vmem, size = 0x4000, scoped, tag = 'input window, operand 1, single buffered']
    #allocation6 [shape = 's32[1]{0}', space=sflag, size = 0x4, scoped, tag = 'scoped memory for tpu_custom_call.1']
    #allocation7 [shape = 'u8[16384]{0}', space=vmem, size = 0x4000, scoped, tag = 'input window, operand 2, single buffered']
    %12 = vsyncpa [#allocation4], 0
    %13 = vsyncpa [#allocation6], 0
    // Predicated region
    $region2: #{tpu_custom_call.1} parent=1 // pred_check
      _
    $region3: #{tpu_custom_call.1} parent=1 // pred_check_branch
      %15 = sbr.rel (0) target = $region5
    $region4: #{tpu_custom_call.1} parent=1 // pred_region
      %s17 = ssub.s32 128, 128
      %18 = vsyncadd [#allocation4], %s17
      %s20 = sshll.u32 [#allocation3], 4
      %s21 = int_to_ptr.vmem [resolvable:$true] %s20
      %23 = dma.hbm_to_vmem [thread:$0]  %s0, 128, %s21, [#allocation4]
    $region5: #{tpu_custom_call.1} parent=1 // pred_fallthru
      _
    // Predicated region
    $region6: #{tpu_custom_call.1} parent=1 // pred_check
      _
    $region7: #{tpu_custom_call.1} parent=1 // pred_check_branch
      %25 = sbr.rel (0) target = $region9
    $region8: #{tpu_custom_call.1} parent=1 // pred_region
      %s27 = ssub.s32 512, 512
      %28 = vsyncadd [#allocation6], %s27
      %s29 = sshll.u32 [#allocation5], 4
      %s30 = int_to_ptr.vmem [resolvable:$true] %s29
      %35 = dma.hbm_to_vmem [thread:$0]  %s1, 512, %s30, [#allocation6], 128, 128, 8
    $region9: #{tpu_custom_call.1} parent=1 // pred_fallthru
      _
    // Predicated region
    $region10: #{tpu_custom_call.1} parent=1 // pred_check
      _
    $region11: #{tpu_custom_call.1} parent=1 // pred_check_branch
      %37 = sbr.rel (0) target = $region13
    $region12: #{tpu_custom_call.1} parent=1 // pred_region
      %s39 = ssub.s32 512, 512
      %40 = vsyncadd [#allocation6], %s39
      %s41 = sshll.u32 [#allocation7], 4
      %s42 = int_to_ptr.vmem [resolvable:$true] %s41
      %47 = dma.hbm_to_vmem [thread:$0]  %s2, 512, %s42, [#allocation6], 128, 128, 8
    $region13: #{tpu_custom_call.1} parent=1 // pred_fallthru
      _
    // Predicated region
    $region14: #{tpu_custom_call.1} parent=1 // pred_check
      _
    $region15: #{tpu_custom_call.1} parent=1 // pred_check_branch
      %49 = sbr.rel (0) target = $region17
    $region16: #{tpu_custom_call.1} parent=1 // pred_region
      _
    $region17: #{tpu_custom_call.1} parent=1 // pred_fallthru
      _
    // Predicated region
    $region18: #{tpu_custom_call.1} parent=1 // pred_check
      _
    $region19: #{tpu_custom_call.1} parent=1 // pred_check_branch
      %51 = sbr.rel (0) target = $region21
    $region20: #{tpu_custom_call.1} parent=1 // pred_region
      _
    $region21: #{tpu_custom_call.1} parent=1 // pred_fallthru
      _
    // Predicated region
    $region22: #{tpu_custom_call.1} parent=1 // pred_check
      _
    $region23: #{tpu_custom_call.1} parent=1 // pred_check_branch
      %53 = sbr.rel (0) target = $region25
    $region24: #{tpu_custom_call.1} parent=1 // pred_region
      _
    $region25: #{tpu_custom_call.1} parent=1 // pred_fallthru
      _
    // Predicated region
    $region26: #{tpu_custom_call.1} parent=1 // pred_check
      _
    $region27: #{tpu_custom_call.1} parent=1 // pred_check_branch
      %55 = sbr.rel (0) target = $region29
    $region28: #{tpu_custom_call.1} parent=1 // pred_region
      %56 = dma.done [#allocation4], 128
    $region29: #{tpu_custom_call.1} parent=1 // pred_fallthru
      _
    // Predicated region
    $region30: #{tpu_custom_call.1} parent=1 // pred_check
      _
    $region31: #{tpu_custom_call.1} parent=1 // pred_check_branch
      %58 = sbr.rel (0) target = $region33
    $region32: #{tpu_custom_call.1} parent=1 // pred_region
      %59 = dma.done [#allocation6], 512
    $region33: #{tpu_custom_call.1} parent=1 // pred_fallthru
      _
    // Predicated region
    $region34: #{tpu_custom_call.1} parent=1 // pred_check
      _
    $region35: #{tpu_custom_call.1} parent=1 // pred_check_branch
      %61 = sbr.rel (0) target = $region37
    $region36: #{tpu_custom_call.1} parent=1 // pred_region
      %62 = dma.done [#allocation6], 512
    $region37: #{tpu_custom_call.1} parent=1 // pred_fallthru
      _
    %v63 = vld [vmem:[#allocation3] sm:$0xff]
    %v64 = vld [vmem:[#allocation5] sm:$0xff]
    %v65 = vld [vmem:[#allocation5 + $0x8] sm:$0xff]
    %v66 = vld [vmem:[#allocation5 + $0x10] sm:$0xff]
    %v67 = vld [vmem:[#allocation5 + $0x18] sm:$0xff]
    %vm68 = vcmask 261120
    %v70 = vsel %vm68, %v63, 0
    %72 = vmatprep.subr.mxu0 0.0
    %73 = vmatpush1.msra.mxu0 %v64
    %74 = vmatprep.subr.mxu0 0.0
    %75 = vmatpush1.msra.mxu0 %v65
    %76 = vmatprep.subr.mxu0 0.0
    %77 = vmatpush1.msra.mxu0 %v66
    %78 = vmatprep.subr.mxu0 0.0
    %79 = vmatpush1.msra.mxu0 %v67
    %80 = vmatprep.subr.mxu0 0.0
    %81 = vmatpush1.msra.mxu0 0.0
    %82 = vmatprep.subr.mxu0 0.0
    %83 = vmatpush1.msra.mxu0 0.0
    %84 = vmatprep.subr.mxu0 0.0
    %85 = vmatpush1.msra.mxu0 0.0
    %86 = vmatprep.subr.mxu0 0.0
    %87 = vmatpush1.msra.mxu0 0.0
    %88 = vmatprep.subr.mxu0 0.0
    %89 = vmatpush1.msra.mxu0 0.0
    %90 = vmatprep.subr.mxu0 0.0
    %91 = vmatpush1.msra.mxu0 0.0
    %92 = vmatprep.subr.mxu0 0.0
    %93 = vmatpush1.msra.mxu0 0.0
    %94 = vmatprep.subr.mxu0 0.0
    %95 = vmatpush1.msra.mxu0 0.0
    %96 = vmatprep.subr.mxu0 0.0
    %97 = vmatpush1.msra.mxu0 0.0
    %98 = vmatprep.subr.mxu0 0.0
    %99 = vmatpush1.msra.mxu0 0.0
    %100 = vmatprep.subr.mxu0 0.0
    %101 = vmatpush1.msra.mxu0 0.0
    %102 = vmatprep.subr.mxu0 0.0
    %103 = vmatpush1.msra.mxu0 0.0
    %104 = vmatprep.subr.mxu0 0.0
    %105 = vmatpush1.msra.mxu0 0.0
    %106 = vmatprep.subr.mxu0 0.0
    %107 = vmatpush1.msra.mxu0 0.0
    %108 = vmatprep.subr.mxu0 0.0
    %109 = vmatpush1.msra.mxu0 0.0
    %110 = vmatprep.subr.mxu0 0.0
    %111 = vmatpush1.msra.mxu0 0.0
    %112 = vmatprep.subr.mxu0 0.0
    %113 = vmatpush1.msra.mxu0 0.0
    %114 = vmatprep.subr.mxu0 0.0
    %115 = vmatpush1.msra.mxu0 0.0
    %116 = vmatprep.subr.mxu0 0.0
    %117 = vmatpush1.msra.mxu0 0.0
    %118 = vmatprep.subr.mxu0 0.0
    %119 = vmatpush1.msra.mxu0 0.0
    %120 = vmatprep.subr.mxu0 0.0
    %121 = vmatpush1.msra.mxu0 0.0
    %122 = vmatprep.subr.mxu0 0.0
    %123 = vmatpush1.msra.mxu0 0.0
    %124 = vmatprep.subr.mxu0 0.0
    %125 = vmatpush1.msra.mxu0 0.0
    %126 = vmatprep.subr.mxu0 0.0
    %127 = vmatpush1.msra.mxu0 0.0
    %128 = vmatprep.subr.mxu0 0.0
    %129 = vmatpush1.msra.mxu0 0.0
    %130 = vmatprep.subr.mxu0 0.0
    %131 = vmatpush1.msra.mxu0 0.0
    %132 = vmatprep.subr.mxu0 0.0
    %133 = vmatpush1.msra.mxu0 0.0
    %134 = vmatprep.subr.mxu0 0.0
    %135 = vmatpush1.msra.mxu0 0.0
    %136 = vmatprep.mubr.f32.mxu0 0.0
    %137 = vmatmul.mubr.f32.gmra.mrb[0].mxu0 %v70
    %v138 = vpop.f32.mrb[0].mxu0
    %v139 = vadd.f32 0.0, %v138
    %v140 = vpop.f32.mrb[0].mxu0
    %141 = vdwg.mxu0
    %v142 = vld [vmem:[#allocation7] sm:$0xff]
    %v143 = vld [vmem:[#allocation7 + $0x8] sm:$0xff]
    %v144 = vld [vmem:[#allocation7 + $0x10] sm:$0xff]
    %v145 = vld [vmem:[#allocation7 + $0x18] sm:$0xff]
    %v146 = vld [vmem:[%s3] sm:$0x1]
    %v148 = vlaneseq
    %v149 = vshrl.u32 %v148, 7
    %v150 = vsub.s32 0, %v149
    %v151 = vrot.slane %v146, %v150
    %v154 = vsel %vm68, %v139, 0
    %156 = vmatprep.subr.mxu0 0.0
    %157 = vmatpush1.msra.mxu0 %v142
    %158 = vmatprep.subr.mxu0 0.0
    %159 = vmatpush1.msra.mxu0 %v143
    %160 = vmatprep.subr.mxu0 0.0
    %161 = vmatpush1.msra.mxu0 %v144
    %162 = vmatprep.subr.mxu0 0.0
    %163 = vmatpush1.msra.mxu0 %v145
    %164 = vmatprep.subr.mxu0 0.0
    %165 = vmatpush1.msra.mxu0 0.0
    %166 = vmatprep.subr.mxu0 0.0
    %167 = vmatpush1.msra.mxu0 0.0
    %168 = vmatprep.subr.mxu0 0.0
    %169 = vmatpush1.msra.mxu0 0.0
    %170 = vmatprep.subr.mxu0 0.0
    %171 = vmatpush1.msra.mxu0 0.0
    %172 = vmatprep.subr.mxu0 0.0
    %173 = vmatpush1.msra.mxu0 0.0
    %174 = vmatprep.subr.mxu0 0.0
    %175 = vmatpush1.msra.mxu0 0.0
    %176 = vmatprep.subr.mxu0 0.0
    %177 = vmatpush1.msra.mxu0 0.0
    %178 = vmatprep.subr.mxu0 0.0
    %179 = vmatpush1.msra.mxu0 0.0
    %180 = vmatprep.subr.mxu0 0.0
    %181 = vmatpush1.msra.mxu0 0.0
    %182 = vmatprep.subr.mxu0 0.0
    %183 = vmatpush1.msra.mxu0 0.0
    %184 = vmatprep.subr.mxu0 0.0
    %185 = vmatpush1.msra.mxu0 0.0
    %186 = vmatprep.subr.mxu0 0.0
    %187 = vmatpush1.msra.mxu0 0.0
    %188 = vmatprep.subr.mxu0 0.0
    %189 = vmatpush1.msra.mxu0 0.0
    %190 = vmatprep.subr.mxu0 0.0
    %191 = vmatpush1.msra.mxu0 0.0
    %192 = vmatprep.subr.mxu0 0.0
    %193 = vmatpush1.msra.mxu0 0.0
    %194 = vmatprep.subr.mxu0 0.0
    %195 = vmatpush1.msra.mxu0 0.0
    %196 = vmatprep.subr.mxu0 0.0
    %197 = vmatpush1.msra.mxu0 0.0
    %198 = vmatprep.subr.mxu0 0.0
    %199 = vmatpush1.msra.mxu0 0.0
    %200 = vmatprep.subr.mxu0 0.0
    %201 = vmatpush1.msra.mxu0 0.0
    %202 = vmatprep.subr.mxu0 0.0
    %203 = vmatpush1.msra.mxu0 0.0
    %204 = vmatprep.subr.mxu0 0.0
    %205 = vmatpush1.msra.mxu0 0.0
    %206 = vmatprep.subr.mxu0 0.0
    %207 = vmatpush1.msra.mxu0 0.0
    %208 = vmatprep.subr.mxu0 0.0
    %209 = vmatpush1.msra.mxu0 0.0
    %210 = vmatprep.subr.mxu0 0.0
    %211 = vmatpush1.msra.mxu0 0.0
    %212 = vmatprep.subr.mxu0 0.0
    %213 = vmatpush1.msra.mxu0 0.0
    %214 = vmatprep.subr.mxu0 0.0
    %215 = vmatpush1.msra.mxu0 0.0
    %216 = vmatprep.subr.mxu0 0.0
    %217 = vmatpush1.msra.mxu0 0.0
    %218 = vmatprep.subr.mxu0 0.0
    %219 = vmatpush1.msra.mxu0 0.0
    %220 = vmatprep.mubr.f32.mxu0 0.0
    %221 = vmatmul.mubr.f32.gmra.mrb[0].mxu0 %v154
    %v222 = vpop.f32.mrb[0].mxu0
    %v223 = vadd.f32 %v151, %v222
    %v224 = vpop.f32.mrb[0].mxu0
    %225 = vdwg.mxu0
    %v226 = vtanh.pop %v223
    %v227 = vld [vmem:[%s4] sm:$0x1]
    %v229 = vlaneseq
    %v230 = vshrl.u32 %v229, 7
    %v231 = vsub.s32 0, %v230
    %v232 = vrot.slane %v227, %v231
    %v234 = vmul.f32 %v226, %v232
    %v235 = vsel %vm68, %v234, 0.0
    %236 = vadd.xlane.f32.xlu0 %v235
    %v237 = vpop.xlane.xlu0 %236
    %s238 = sld [smem:[#allocation2]]
    %v239 = vstv %s238
    %v240 = vadd.f32 %v237, %v239
    %vm241 = vcmask 7168
    %242 = vst.msk [vmem:[%s6] sm:$0xff] %vm241, %v240
    // Predicated region
    $region38: #{tpu_custom_call.1} parent=1 // pred_check
      _
    $region39: #{tpu_custom_call.1} parent=1 // pred_check_branch
      %244 = sbr.rel (0) target = $region41
    $region40: #{tpu_custom_call.1} parent=1 // pred_region
      _
    $region41: #{tpu_custom_call.1} parent=1 // pred_fallthru
      _
    // Predicated region
    $region42: #{tpu_custom_call.1} parent=1 // pred_check
      _
    $region43: #{tpu_custom_call.1} parent=1 // pred_check_branch
      %246 = sbr.rel (0) target = $region45
    $region44: #{tpu_custom_call.1} parent=1 // pred_region
      _
    $region45: #{tpu_custom_call.1} parent=1 // pred_fallthru
      _
    %247 = vsyncpa [#allocation4], 1
    %248 = vsyncpa [#allocation6], 1

</llo_original>
